<compile_context>
chip_gen: v5e
topology: v5e:2x2
jax: 0.10.0
libtpu: 0.0.40
codegen_flags: <defaults>
</compile_context>

<pallas_src>
import jax
import jax.numpy as jnp
from jax.experimental import pallas as pl
from jax.experimental.pallas import tpu as pltpu

_LANE = 128
_SUBLANE = 8
# Per-tile byte budget.  One pallas_call has 1 input + 1 output, each
# double-buffered => ~4 * tile bytes of VMEM.  2 MiB keeps that at ~8 MiB,
# comfortably inside v5e's 16 MiB default scoped VMEM and v7x's 64 MiB.
_TARGET_TILE_BYTES = 2 * 1024 * 1024


def _copy_tile_kernel(src_ref, dst_ref):
    # torch.clone(x).detach() -> materialized copy of the current tile.
    # (No where-mask: the networkx round trip is the identity on adj.)
    dst_ref[...] = src_ref[...]


def _pick_tiles(rows, cols, itemsize):
    """Lane-dense tiles (last dim = full width or a big multiple of 128),
    capped at ~_TARGET_TILE_BYTES per tile, row tile a multiple of 8."""
    # Column tile: keep the full width when even 8 rows of it fit the budget
    # (best lane density / unmasked vst); otherwise a large multiple of 128.
    if cols * itemsize * _SUBLANE <= _TARGET_TILE_BYTES or cols <= _LANE:
        tc = cols
    else:
        tc = (_TARGET_TILE_BYTES // (_SUBLANE * itemsize)) // _LANE * _LANE
        tc = max(_LANE, min(tc, (cols // _LANE) * _LANE))
    # Row tile: as many rows as fit the budget; full height or a multiple of 8.
    max_tr = _TARGET_TILE_BYTES // max(1, tc * itemsize)
    if rows <= max_tr:
        tr = rows
    else:
        tr = max(_SUBLANE, (max_tr // _SUBLANE) * _SUBLANE)
    return tr, tc


def _tiled_copy(arr):
    rows, cols = arr.shape
    itemsize = jnp.dtype(arr.dtype).itemsize
    tr, tc = _pick_tiles(rows, cols, itemsize)
    grid = (pl.cdiv(rows, tr), pl.cdiv(cols, tc))
    return pl.pallas_call(
        _copy_tile_kernel,
        out_shape=jax.ShapeDtypeStruct((rows, cols), arr.dtype),
        grid=grid,
        in_specs=[pl.BlockSpec((tr, tc), lambda i, j: (i, j))],
        out_specs=pl.BlockSpec((tr, tc), lambda i, j: (i, j)),
        compiler_params=pltpu.CompilerParams(
            # Tiles are fully independent: shard across both TensorCores on
            # v7x (harmless on single-TC v5e/v6e).
            dimension_semantics=("parallel", "parallel"),
        ),
    )(arr)


def base_predictor_forward(x, adj, *, force_kernel=False):
    """Pallas equivalent of BasePredictor.forward's concrete tensor path.

    Returns (x_clone, adj_clone): the node-feature array and adjacency matrix
    that back the networkx graph handed to the (abstract) predict().  The
    array2networkx -> networkx2array round trip is the identity, so the only
    tensor work is the clone/detach copy.
    """
    n, f = x.shape
    assert adj.shape == (n, n)
    if not force_kernel:
        # JAX arrays are immutable, so clone/detach is semantically a no-op;
        # for sub-vreg-sized inputs a kernel launch is pure overhead.
        total_bytes = (n * f * jnp.dtype(x.dtype).itemsize
                       + n * n * jnp.dtype(adj.dtype).itemsize)
        if total_bytes <= 4096:
            return x, adj
    return _tiled_copy(x), _tiled_copy(adj)


# TODO(synk): fit()/predict() are @abstractmethod (NotImplementedError) and the
# networkx graph object itself is host-side bookkeeping — no Pallas equivalent.


if __name__ == "__main__":
    key = jax.random.PRNGKey(0)
    k_x, k_adj = jax.random.split(key)

    num_nodes = 256   # graph size (lane-aligned adjacency)
    feat_dim = 128    # per-node 'op_name' feature width (multiple of 128)

    x = jax.random.normal(k_x, (num_nodes, feat_dim), dtype=jnp.float32)
    # sparse-ish directed adjacency with explicit zeros
    raw = jax.random.uniform(k_adj, (num_nodes, num_nodes), dtype=jnp.float32)
    adj = jnp.where(raw > 0.6, raw, 0.0)

    x_out, adj_out = base_predictor_forward(x, adj)
    jax.block_until_ready((x_out, adj_out))

    # reference check: forward's concrete tensor path is an exact copy
    assert jnp.allclose(x_out, x)
    assert jnp.allclose(adj_out, adj)

    print("KERNEL_OK")
</pallas_src>

<mosaic_0001>
module attributes {stable_mosaic.version = 11 : i64} {
  func.func @_copy_tile_kernel(%arg0: i32, %arg1: i32, %arg2: memref<256x128xf32, #tpu.memory_space<vmem>>, %arg3: memref<256x128xf32, #tpu.memory_space<vmem>>) attributes {dimension_semantics = [#tpu.dimension_semantics<parallel>, #tpu.dimension_semantics<parallel>], iteration_bounds = array<i64: 1, 1>, scalar_prefetch = 0 : i64, scratch_operands = 0 : i64, tpu.core_type = #tpu.core_type<tc>, window_params = [{transform_indices = @transform_0, window_bounds = array<i64: 256, 128>}, {transform_indices = @transform_1, window_bounds = array<i64: 256, 128>}]} {
    %c0 = arith.constant 0 : index
    %c0_0 = arith.constant 0 : index
    %0 = vector.load %arg2[%c0, %c0_0] : memref<256x128xf32, #tpu.memory_space<vmem>>, vector<256x128xf32>
    %c0_1 = arith.constant 0 : index
    %c0_2 = arith.constant 0 : index
    %1 = vector.load %arg3[%c0_1, %c0_2] : memref<256x128xf32, #tpu.memory_space<vmem>>, vector<256x128xf32>
    tpu.vector_store %arg3[%c0_1, %c0_2], %0 {strides = array<i32>} : memref<256x128xf32, #tpu.memory_space<vmem>>, vector<256x128xf32>,
    return
  }
  func.func @transform_0(%arg0: i32, %arg1: i32) -> (i32, i32) {
    %c0_i32 = arith.constant 0 : i32
    return %arg0, %arg1 : i32, i32
  }
  func.func @transform_1(%arg0: i32, %arg1: i32) -> (i32, i32) {
    %c0_i32 = arith.constant 0 : i32
    return %arg0, %arg1 : i32, i32
  }
}

</mosaic_0001>

<llo_original>
// kernel: tpu_custom_call.1
$region0: #{tpu_custom_call.1}
  #allocation0 [shape = 'u32[]', space=smem, size = 0x4, offset = 0x4, fixed_abs, tag = 'smem constant byte address 0x4 - core index']
  #allocation1 [shape = 'u32[72,128]{1,0:T(1,128)}', space=vmem, size = 0x9000, scoped, tag = 'internal scratch']
  %s0 = inlined_call_operand.hbm [shape: f32[256,128], index: 0, kind: input, shape index: {}]
  %s1 = inlined_call_operand.hbm [shape: f32[256,128], index: 1, kind: output, shape index: {}]
  %s2 = sld [smem:[#allocation0]]
  $region18: #{tpu_custom_call.1} parent=0
    _
  %s4 = ssub.s32 1, %s2
  %s5 = scalar_select 0, %s4, %s2
  $region1: #{tpu_custom_call.1} parent=0
    #allocation2 [shape = 'u8[131072]{0}', space=vmem, size = 0x20000, scoped, tag = 'input window, operand 0, single buffered']
    #allocation3 [shape = 's32[1]{0}', space=sflag, size = 0x4, scoped, tag = 'scoped memory for tpu_custom_call.1']
    #allocation4 [shape = 's32[1]{0}', space=sflag, size = 0x4, scoped, tag = 'scoped memory for tpu_custom_call.1']
    #allocation5 [shape = 'u8[131072]{0}', space=vmem, size = 0x20000, scoped, tag = 'output window, operand 0, single buffered']
    %6 = vsyncpa [#allocation3], 0
    %7 = vsyncpa [#allocation4], 0
    // Predicated region
    $region2: #{tpu_custom_call.1} parent=1 // pred_check
      _
    $region3: #{tpu_custom_call.1} parent=1 // pred_check_branch
      %9 = sbr.rel (0) target = $region5
    $region4: #{tpu_custom_call.1} parent=1 // pred_region
      %11 = vsyncadd [#allocation3], 0
      %s12 = sshll.u32 %s0, 4
      %s13 = int_to_ptr.hbm [resolvable:$true] %s12
      %s14 = sshll.u32 [#allocation2], 4
      %s15 = int_to_ptr.vmem [resolvable:$true] %s14
      %20 = dma.hbm_to_vmem [thread:$0]  %s13, 4096, %s15, [#allocation3], 128, 128, 8
    $region5: #{tpu_custom_call.1} parent=1 // pred_fallthru
      _
    // Predicated region
    $region6: #{tpu_custom_call.1} parent=1 // pred_check
      _
    $region7: #{tpu_custom_call.1} parent=1 // pred_check_branch
      %22 = sbr.rel (0) target = $region9
    $region8: #{tpu_custom_call.1} parent=1 // pred_region
      %24 = dma.done [#allocation3], 4096
    $region9: #{tpu_custom_call.1} parent=1 // pred_fallthru
      _
    %v25 = vld [vmem:[#allocation2] sm:$0xff]
    %v26 = vld [vmem:[#allocation2 + $0x8] sm:$0xff]
    %v27 = vld [vmem:[#allocation2 + $0x10] sm:$0xff]
    %v28 = vld [vmem:[#allocation2 + $0x18] sm:$0xff]
    %v29 = vld [vmem:[#allocation2 + $0x20] sm:$0xff]
    %v30 = vld [vmem:[#allocation2 + $0x28] sm:$0xff]
    %v31 = vld [vmem:[#allocation2 + $0x30] sm:$0xff]
    %v32 = vld [vmem:[#allocation2 + $0x38] sm:$0xff]
    %v33 = vld [vmem:[#allocation2 + $0x40] sm:$0xff]
    %v34 = vld [vmem:[#allocation2 + $0x48] sm:$0xff]
    %v35 = vld [vmem:[#allocation2 + $0x50] sm:$0xff]
    %v36 = vld [vmem:[#allocation2 + $0x58] sm:$0xff]
    %v37 = vld [vmem:[#allocation2 + $0x60] sm:$0xff]
    %v38 = vld [vmem:[#allocation2 + $0x68] sm:$0xff]
    %v39 = vld [vmem:[#allocation2 + $0x70] sm:$0xff]
    %v40 = vld [vmem:[#allocation2 + $0x78] sm:$0xff]
    %v41 = vld [vmem:[#allocation2 + $0x80] sm:$0xff]
    %v42 = vld [vmem:[#allocation2 + $0x88] sm:$0xff]
    %v43 = vld [vmem:[#allocation2 + $0x90] sm:$0xff]
    %v44 = vld [vmem:[#allocation2 + $0x98] sm:$0xff]
    %v45 = vld [vmem:[#allocation2 + $0xa0] sm:$0xff]
    %v46 = vld [vmem:[#allocation2 + $0xa8] sm:$0xff]
    %v47 = vld [vmem:[#allocation2 + $0xb0] sm:$0xff]
    %v48 = vld [vmem:[#allocation2 + $0xb8] sm:$0xff]
    %v49 = vld [vmem:[#allocation2 + $0xc0] sm:$0xff]
    %v50 = vld [vmem:[#allocation2 + $0xc8] sm:$0xff]
    %v51 = vld [vmem:[#allocation2 + $0xd0] sm:$0xff]
    %v52 = vld [vmem:[#allocation2 + $0xd8] sm:$0xff]
    %v53 = vld [vmem:[#allocation2 + $0xe0] sm:$0xff]
    %v54 = vld [vmem:[#allocation2 + $0xe8] sm:$0xff]
    %v55 = vld [vmem:[#allocation2 + $0xf0] sm:$0xff]
    %v56 = vld [vmem:[#allocation2 + $0xf8] sm:$0xff]
    %57 = vst [vmem:[#allocation5] sm:$0xff] %v25
    %58 = vst [vmem:[#allocation5 + $0x8] sm:$0xff] %v26
    %59 = vst [vmem:[#allocation5 + $0x10] sm:$0xff] %v27
    %60 = vst [vmem:[#allocation5 + $0x18] sm:$0xff] %v28
    %61 = vst [vmem:[#allocation5 + $0x20] sm:$0xff] %v29
    %62 = vst [vmem:[#allocation5 + $0x28] sm:$0xff] %v30
    %63 = vst [vmem:[#allocation5 + $0x30] sm:$0xff] %v31
    %64 = vst [vmem:[#allocation5 + $0x38] sm:$0xff] %v32
    %65 = vst [vmem:[#allocation5 + $0x40] sm:$0xff] %v33
    %66 = vst [vmem:[#allocation5 + $0x48] sm:$0xff] %v34
    %67 = vst [vmem:[#allocation5 + $0x50] sm:$0xff] %v35
    %68 = vst [vmem:[#allocation5 + $0x58] sm:$0xff] %v36
    %69 = vst [vmem:[#allocation5 + $0x60] sm:$0xff] %v37
    %70 = vst [vmem:[#allocation5 + $0x68] sm:$0xff] %v38
    %71 = vst [vmem:[#allocation5 + $0x70] sm:$0xff] %v39
    %72 = vst [vmem:[#allocation5 + $0x78] sm:$0xff] %v40
    %73 = vst [vmem:[#allocation5 + $0x80] sm:$0xff] %v41
    %74 = vst [vmem:[#allocation5 + $0x88] sm:$0xff] %v42
    %75 = vst [vmem:[#allocation5 + $0x90] sm:$0xff] %v43
    %76 = vst [vmem:[#allocation5 + $0x98] sm:$0xff] %v44
    %77 = vst [vmem:[#allocation5 + $0xa0] sm:$0xff] %v45
    %78 = vst [vmem:[#allocation5 + $0xa8] sm:$0xff] %v46
    %79 = vst [vmem:[#allocation5 + $0xb0] sm:$0xff] %v47
    %80 = vst [vmem:[#allocation5 + $0xb8] sm:$0xff] %v48
    %81 = vst [vmem:[#allocation5 + $0xc0] sm:$0xff] %v49
    %82 = vst [vmem:[#allocation5 + $0xc8] sm:$0xff] %v50
    %83 = vst [vmem:[#allocation5 + $0xd0] sm:$0xff] %v51
    %84 = vst [vmem:[#allocation5 + $0xd8] sm:$0xff] %v52
    %85 = vst [vmem:[#allocation5 + $0xe0] sm:$0xff] %v53
    %86 = vst [vmem:[#allocation5 + $0xe8] sm:$0xff] %v54
    %87 = vst [vmem:[#allocation5 + $0xf0] sm:$0xff] %v55
    %88 = vst [vmem:[#allocation5 + $0xf8] sm:$0xff] %v56
    // Predicated region
    $region10: #{tpu_custom_call.1} parent=1 // pred_check
      _
    $region11: #{tpu_custom_call.1} parent=1 // pred_check_branch
      %90 = sbr.rel (0) target = $region13
    $region12: #{tpu_custom_call.1} parent=1 // pred_region
      %92 = vsyncadd [#allocation4], 0
      %s93 = sshll.u32 [#allocation5], 4
      %s94 = int_to_ptr.vmem [resolvable:$true] %s93
      %s95 = sshll.u32 %s1, 4
      %s96 = int_to_ptr.hbm [resolvable:$true] %s95
      %101 = dma.vmem_to_hbm [thread:$0]  %s94, 4096, %s96, [#allocation4], 128, 128, 8
    $region13: #{tpu_custom_call.1} parent=1 // pred_fallthru
      _
    // Predicated region
    $region14: #{tpu_custom_call.1} parent=1 // pred_check
      _
    $region15: #{tpu_custom_call.1} parent=1 // pred_check_branch
      %103 = sbr.rel (0) target = $region17
    $region16: #{tpu_custom_call.1} parent=1 // pred_region
      %105 = dma.done [#allocation4], 4096
    $region17: #{tpu_custom_call.1} parent=1 // pred_fallthru
      _
    %106 = vsyncpa [#allocation3], 1
    %107 = vsyncpa [#allocation4], 1

</llo_original>
